<compile_context>
chip_gen: v7x
topology: tpu7x:2x2x1
jax: 0.10.0
libtpu: 0.0.40
codegen_flags: <defaults>
</compile_context>

<pallas_src>
import functools
import math

import jax
import jax.numpy as jnp
from jax import lax
from jax.experimental import pallas as pl
from jax.experimental.pallas import tpu as pltpu


def _round_up(x, mult):
    return ((x + mult - 1) // mult) * mult


def _sublane_multiple(dtype):
    return {4: 8, 2: 16, 1: 32}.get(jnp.dtype(dtype).itemsize, 8)


def _choose_tile(dim, align, max_tile):
    """Pick a tile size for `dim`.

    If the whole dim fits in one tile, use the exact dim (always a legal layout,
    zero raggedness).  Otherwise pick the multiple of `align` (<= max_tile) that
    minimizes the padded extent ceil(dim/t)*t, tie-breaking toward the largest
    tile (fewer grid steps, fewer HBM re-reads of the other operand)."""
    if dim <= 0:
        return max(align, 1)
    max_tile = max(align, (max_tile // align) * align)
    if dim <= max_tile:
        return dim
    best_t, best_padded = align, _round_up(dim, align)
    for t in range(align, max_tile + 1, align):
        padded = _round_up(dim, t)
        if padded < best_padded or (padded == best_padded and t > best_t):
            best_t, best_padded = t, padded
    return best_t


def _make_linear_kernel(*, has_bias, acc_in_out, w_transposed, k_valid, tk):
    """Build the matmul kernel for a fixed static configuration."""
    ragged_k = (k_valid % tk) != 0
    # (tm,tk) x (tk,tn) for transposed weight, (tm,tk) x (tn,tk) for module layout.
    contract = (((1,), (0,)), ((), ())) if w_transposed else (((1,), (1,)), ((), ()))
    w_k_axis = 0 if w_transposed else 1

    def kernel(*refs):
        idx = 0
        x_ref = refs[idx]; idx += 1
        w_ref = refs[idx]; idx += 1
        b_ref = None
        if has_bias:
            b_ref = refs[idx]; idx += 1
        o_ref = refs[idx]; idx += 1
        acc_ref = o_ref if acc_in_out else refs[idx]

        k = pl.program_id(2)

        @pl.when(k == 0)
        def _():
            if has_bias:
                # Bias is folded into the accumulator init -> added exactly once.
                acc_ref[...] = jnp.broadcast_to(
                    b_ref[...].astype(acc_ref.dtype), acc_ref.shape)
            else:
                acc_ref[...] = jnp.zeros_like(acc_ref)

        x_val = x_ref[...]
        w_val = w_ref[...]
        if ragged_k:
            # Last K block is ragged: zero BOTH operands beyond in_features so
            # unspecified out-of-bounds bytes (possibly NaN) contribute 0*0 = 0.
            limit = k_valid - k * tk
            x_val = jnp.where(
                lax.broadcasted_iota(jnp.int32, x_val.shape, 1) < limit, x_val, 0)
            w_val = jnp.where(
                lax.broadcasted_iota(jnp.int32, w_val.shape, w_k_axis) < limit,
                w_val, 0)

        acc_ref[...] += lax.dot_general(
            x_val, w_val,
            dimension_numbers=contract,
            preferred_element_type=jnp.float32)

        if not acc_in_out:
            @pl.when(k == pl.num_programs(2) - 1)
            def _():
                o_ref[...] = acc_ref[...].astype(o_ref.dtype)

    return kernel


@functools.partial(
    jax.jit,
    static_argnames=("weight_is_transposed", "block_m", "block_n", "block_k"))
def column_parallel_linear(x, weight, bias=None, *, weight_is_transposed=False,
                           block_m=512, block_n=512, block_k=1024):
    """Forward of ColumnParallelLinear with topology=None.

    x:      (..., in_features)
    weight: (out_features, in_features)   [PyTorch layout], or
            (in_features, out_features)   if weight_is_transposed=True
            (transpose once at parameter-load time -> MXU-friendly layout).
    bias:   (out_features,) or None
    """
    if weight_is_transposed:
        in_features, out_features = weight.shape
    else:
        out_features, in_features = weight.shape
    assert x.shape[-1] == in_features

    out_dtype = x.dtype
    lead_shape = x.shape[:-1]
    m = math.prod(lead_shape) if lead_shape else 1

    # Degenerate shapes: nothing for the MXU to do.
    if m == 0 or out_features == 0 or in_features == 0:
        out2d = jnp.zeros((m, out_features), dtype=out_dtype)
        if bias is not None:
            out2d = out2d + bias.astype(out_dtype)
        return out2d.reshape(*lead_shape, out_features)

    x2d = x.reshape(m, in_features)
    has_bias = bias is not None
    b2d = bias.reshape(1, out_features) if has_bias else None

    # ---- Tile selection: padding-aware, dtype-aware, no per-call jnp.pad ----
    sub = _sublane_multiple(x.dtype)
    tm = _choose_tile(m, sub, block_m)
    tn = _choose_tile(out_features, 128, block_n)
    tk = _choose_tile(in_features, 128, block_k)

    grid_m = pl.cdiv(m, tm)
    grid_n = pl.cdiv(out_features, tn)
    # Keep the parallel (i, j) grid >= 2 so both v7x TensorCores get work
    # (only triggers when the whole problem fits a single output tile).
    if grid_m * grid_n < 2:
        n_lane = _round_up(out_features, 128)
        m_sub = _round_up(m, sub)
        if n_lane >= 2 * 128:
            tn = _round_up(n_lane // 2, 128)
        elif m_sub >= 2 * sub:
            tm = _round_up(m_sub // 2, sub)
        grid_m = pl.cdiv(m, tm)
        grid_n = pl.cdiv(out_features, tn)
    grid_k = pl.cdiv(in_features, tk)
    grid = (grid_m, grid_n, grid_k)

    # f32 outputs accumulate in-place in the resident output block (no scratch,
    # no epilogue copy); other output dtypes use an f32 scratch accumulator.
    acc_in_out = jnp.dtype(out_dtype) == jnp.dtype(jnp.float32)

    kernel = _make_linear_kernel(
        has_bias=has_bias, acc_in_out=acc_in_out,
        w_transposed=weight_is_transposed, k_valid=in_features, tk=tk)

    in_specs = [pl.BlockSpec((tm, tk), lambda i, j, k: (i, k))]            # x
    if weight_is_transposed:
        in_specs.append(pl.BlockSpec((tk, tn), lambda i, j, k: (k, j)))    # (in, out)
    else:
        in_specs.append(pl.BlockSpec((tn, tk), lambda i, j, k: (j, k)))    # (out, in)
    if has_bias:
        in_specs.append(pl.BlockSpec((1, tn), lambda i, j, k: (0, j)))     # bias
    out_specs = pl.BlockSpec((tm, tn), lambda i, j, k: (i, j))
    scratch_shapes = [] if acc_in_out else [pltpu.VMEM((tm, tn), jnp.float32)]

    # Scoped-VMEM budget: double-buffered inputs/outputs + accumulator + headroom,
    # capped at 64 MiB so the same config is safe on v7x (64 MiB physical / TC).
    x_bytes = tm * tk * jnp.dtype(x.dtype).itemsize
    w_bytes = tn * tk * jnp.dtype(weight.dtype).itemsize
    b_bytes = tn * jnp.dtype(bias.dtype).itemsize if has_bias else 0
    o_bytes = tm * tn * jnp.dtype(out_dtype).itemsize
    est = 2 * (x_bytes + w_bytes + b_bytes + o_bytes)
    if not acc_in_out:
        est += tm * tn * 4
    vmem_limit = int(min(max(est + (8 << 20), 32 << 20), 64 << 20))

    cost = pl.CostEstimate(
        flops=2 * m * in_features * out_features,
        transcendentals=0,
        bytes_accessed=(x2d.size * x2d.dtype.itemsize
                        + weight.size * weight.dtype.itemsize
                        + (b2d.size * b2d.dtype.itemsize if has_bias else 0)
                        + m * out_features * jnp.dtype(out_dtype).itemsize),
    )

    operands = (x2d, weight) + ((b2d,) if has_bias else ())

    out2d = pl.pallas_call(
        kernel,
        out_shape=jax.ShapeDtypeStruct((m, out_features), out_dtype),
        grid_spec=pltpu.PrefetchScalarGridSpec(
            num_scalar_prefetch=0,
            grid=grid,
            in_specs=in_specs,
            out_specs=out_specs,
            scratch_shapes=scratch_shapes,
        ),
        compiler_params=pltpu.CompilerParams(
            dimension_semantics=("parallel", "parallel", "arbitrary"),
            vmem_limit_bytes=vmem_limit,
        ),
        cost_estimate=cost,
    )(*operands)

    return out2d.reshape(*lead_shape, out_features)


def init_params(key, in_features, out_features, dtype=jnp.float32):
    """Deterministic xavier_normal_ weight init + zero bias (matches module __init__)."""
    std = (2.0 / (in_features + out_features)) ** 0.5
    weight = (std * jax.random.normal(key, (out_features, in_features))).astype(dtype)
    bias = jnp.zeros((out_features,), dtype=dtype)
    return weight, bias


if __name__ == "__main__":
    key = jax.random.PRNGKey(0)
    k_x, k_w, k_x2, k_w2, k_x3, k_w3 = jax.random.split(key, 6)

    # --- Test 1: module defaults (f32, bias, PyTorch weight layout), small shapes.
    batch, seq, in_features, out_features = 2, 8, 32, 64
    x = jax.random.normal(k_x, (batch, seq, in_features), dtype=jnp.float32)
    weight, bias = init_params(k_w, in_features, out_features, dtype=jnp.float32)
    out = jax.block_until_ready(column_parallel_linear(x, weight, bias))
    ref = x @ weight.T + bias
    assert out.shape == (batch, seq, out_features)
    assert jnp.allclose(out, ref, atol=1e-5, rtol=1e-5)

    # --- Test 2: ragged / awkward shapes, no bias; weight pre-transposed ONCE at
    #     "parameter-load time" to the MXU-friendly (in, out) layout.
    x2 = jax.random.normal(k_x2, (3, 67, 384), dtype=jnp.float32)
    w2, _ = init_params(k_w2, 384, 640, dtype=jnp.float32)
    w2_t = w2.T  # one-time layout change, amortized over every forward call
    out2 = jax.block_until_ready(
        column_parallel_linear(x2, w2_t, None, weight_is_transposed=True))
    ref2 = x2 @ w2.T
    assert out2.shape == (3, 67, 640)
    assert jnp.allclose(out2, ref2, atol=1e-4, rtol=1e-4)

    # --- Test 3: bf16 params/activations (f32 scratch accumulator path) with
    #     ragged M/N/K edges and a multi-step K loop (in-kernel K masking).
    x3 = jax.random.normal(k_x3, (4, 39, 200), dtype=jnp.bfloat16)
    w3, b3 = init_params(k_w3, 200, 176, dtype=jnp.bfloat16)
    out3 = jax.block_until_ready(
        column_parallel_linear(x3, w3, b3, block_m=64, block_n=128, block_k=128))
    ref3 = (x3.astype(jnp.float32) @ w3.astype(jnp.float32).T
            + b3.astype(jnp.float32))
    assert out3.shape == (4, 39, 176)
    assert jnp.allclose(out3.astype(jnp.float32), ref3, atol=4e-2, rtol=4e-2)

    print("KERNEL_OK")
</pallas_src>

<mosaic_0001>
module attributes {stable_mosaic.version = 11 : i64} {
  func.func @kernel(%arg0: i32, %arg1: i32, %arg2: i32, %arg3: memref<8x32xf32, #tpu.memory_space<vmem>>, %arg4: memref<64x32xf32, #tpu.memory_space<vmem>>, %arg5: memref<1x64xf32, #tpu.memory_space<vmem>>, %arg6: memref<8x64xf32, #tpu.memory_space<vmem>>) attributes {dimension_semantics = [#tpu.dimension_semantics<parallel>, #tpu.dimension_semantics<parallel>, #tpu.dimension_semantics<arbitrary>], iteration_bounds = array<i64: 2, 1, 1>, scalar_prefetch = 0 : i64, scratch_operands = 0 : i64, tpu.core_type = #tpu.core_type<tc>, window_params = [{transform_indices = @transform_0, window_bounds = array<i64: 8, 32>}, {transform_indices = @transform_1, window_bounds = array<i64: 64, 32>}, {transform_indices = @transform_2, window_bounds = array<i64: 1, 64>}, {transform_indices = @transform_3, window_bounds = array<i64: 8, 64>}]} {
    %c0_i32 = arith.constant 0 : i32
    %0 = arith.cmpi eq, %arg2, %c0_i32 : i32
    %1 = arith.extui %0 : i1 to i32
    %c0_i32_0 = arith.constant 0 : i32
    %2 = arith.cmpi ne, %1, %c0_i32_0 : i32
    scf.if %2 {
      %c0_8 = arith.constant 0 : index
      %c0_9 = arith.constant 0 : index
      %9 = vector.load %arg5[%c0_8, %c0_9] : memref<1x64xf32, #tpu.memory_space<vmem>>, vector<1x64xf32>
      %10 = vector.shape_cast %9 : vector<1x64xf32> to vector<1x64xf32>
      %11 = vector.broadcast %10 : vector<1x64xf32> to vector<8x64xf32>
      %c0_10 = arith.constant 0 : index
      %c0_11 = arith.constant 0 : index
      %12 = vector.load %arg6[%c0_10, %c0_11] : memref<8x64xf32, #tpu.memory_space<vmem>>, vector<8x64xf32>
      tpu.vector_store %arg6[%c0_10, %c0_11], %11 {strides = array<i32>} : memref<8x64xf32, #tpu.memory_space<vmem>>, vector<8x64xf32>,
    } else {
    }
    %c0 = arith.constant 0 : index
    %c0_1 = arith.constant 0 : index
    %3 = vector.load %arg3[%c0, %c0_1] : memref<8x32xf32, #tpu.memory_space<vmem>>, vector<8x32xf32>
    %c0_2 = arith.constant 0 : index
    %c0_3 = arith.constant 0 : index
    %4 = vector.load %arg4[%c0_2, %c0_3] : memref<64x32xf32, #tpu.memory_space<vmem>>, vector<64x32xf32>
    %c0_4 = arith.constant 0 : index
    %c0_5 = arith.constant 0 : index
    %5 = vector.load %arg6[%c0_4, %c0_5] : memref<8x64xf32, #tpu.memory_space<vmem>>, vector<8x64xf32>
    %cst = arith.constant dense<0.000000e+00> : vector<8x64xf32>
    %6 = tpu.matmul %3, %4, %cst {dimension_numbers = #tpu.dot_dimension_numbers<[1], [1], [0], [0], [0, 0, 1, 0], [], []>} : vector<8x32xf32>, vector<64x32xf32>, vector<8x64xf32> -> vector<8x64xf32>
    %7 = arith.addf %5, %6 : vector<8x64xf32>
    %c0_6 = arith.constant 0 : index
    %c0_7 = arith.constant 0 : index
    %8 = vector.load %arg6[%c0_6, %c0_7] : memref<8x64xf32, #tpu.memory_space<vmem>>, vector<8x64xf32>
    tpu.vector_store %arg6[%c0_6, %c0_7], %7 {strides = array<i32>} : memref<8x64xf32, #tpu.memory_space<vmem>>, vector<8x64xf32>,
    return
  }
  func.func @transform_0(%arg0: i32, %arg1: i32, %arg2: i32) -> (i32, i32) {
    %c0_i32 = arith.constant 0 : i32
    return %arg0, %arg2 : i32, i32
  }
  func.func @transform_1(%arg0: i32, %arg1: i32, %arg2: i32) -> (i32, i32) {
    %c0_i32 = arith.constant 0 : i32
    return %arg1, %arg2 : i32, i32
  }
  func.func @transform_2(%arg0: i32, %arg1: i32, %arg2: i32) -> (i32, i32) {
    %c0_i32 = arith.constant 0 : i32
    %c0_i32_0 = arith.constant 0 : i32
    return %c0_i32, %arg1 : i32, i32
  }
  func.func @transform_3(%arg0: i32, %arg1: i32, %arg2: i32) -> (i32, i32) {
    %c0_i32 = arith.constant 0 : i32
    return %arg0, %arg1 : i32, i32
  }
}

</mosaic_0001>

<llo_original>
// kernel: column_parallel_linear.1
$region0: #{column_parallel_linear.1}
  #allocation0 [shape = 'u32[]', space=smem, size = 0x4, offset = 0x4, fixed_abs, tag = 'smem constant byte address 0x4 - core index']
  #allocation1 [shape = 'u32[144,128]{1,0:T(1,128)}', space=vmem, size = 0x12000, scoped, tag = 'internal scratch']
  %s0 = inlined_call_operand.vmem [shape: f32[16,32], index: 0, kind: input, shape index: {}]
  %s1 = inlined_call_operand.vmem [shape: f32[64,32], index: 1, kind: input, shape index: {}]
  %s2 = inlined_call_operand.vmem [shape: f32[1,64], index: 2, kind: input, shape index: {}]
  %s3 = inlined_call_operand.hbm [shape: f32[16,64], index: 3, kind: output, shape index: {}]
  %s4 = sld [smem:[#allocation0]]
  $region49: #{column_parallel_linear.1} parent=0
    _
  %s6 = ssub.s32 1, %s4
  %s7 = scalar_select 0, %s6, %s4
  $region1: #{column_parallel_linear.1} parent=0
    #allocation2 [shape = 'u8[8192]{0}', space=vmem, size = 0x2000, scoped, tag = 'output window, operand 0']
    #allocation3 [shape = 's32[2]{0}', space=sflag, size = 0x8, scoped, tag = 'scoped memory for column_parallel_linear.1']
    %8 = vsyncpa [#allocation3], 0
    %s9 = scalar_lea.sflag [#allocation3], 1
    %10 = vsyncpa %s9, 0
    loop: start=0, step=1, limit=4
    $region2: #{column_parallel_linear.1} parent=1 // loop_pre_header
      _
    $region3: #{column_parallel_linear.1} parent=1 // loop_header
      %s12 = sphi 0, %s16
      %p13 = scmp.ge.s32.totalorder %s12, 4
      %s19 = sphi 0, %s38
      %s20 = sphi 0, %s34
      %s21 = sphi 0, %s30
      %s22 = sphi 0, %s19
      %s23 = sphi 0, %s20
      %s24 = sphi 0, %s21
      %s25 = sphi 0, %s22
      %s26 = sphi 0, %s23
      %s27 = sphi 0, %s24
      %s43 = sphi 0, %s45
      %s46 = sphi 0, %s43
      %s47 = sphi 0, %s46
      %s63 = sphi 0, %s47
      %s71 = sphi 0, %s73
      %s74 = sphi 0, %s71
      %s75 = sphi 0, %s74
      %s91 = sphi 0, %s75
      %s97 = sphi 0, %s99
      %s100 = sphi 0, %s97
      %s101 = sphi 0, %s100
      %s117 = sphi 0, %s101
      %s125 = sphi 0, %s127
      %s128 = sphi 0, %s125
      %s129 = sphi 0, %s128
      %s145 = sphi 0, %s129
    $region4: #{column_parallel_linear.1} parent=1 // loop_header_branch
      %15 = sbr.rel (%p13) target = $region8
    $region5: #{column_parallel_linear.1} parent=1 // loop_body
      %s17 = ssub.s32 %s12, 1
      %s18 = ssub.s32 %s12, 2
      %s28 = sadd.s32 1, %s21
      %p29 = scmp.ge.s32.totalorder %s28, 1
      %s30 = scalar_select %p29, 0, %s28
      %s31 = sadd.s32 1, %s20
      %s32 = scalar_select %p29, %s31, %s20
      %p33 = scmp.ge.s32.totalorder %s32, 1
      %s34 = scalar_select %p33, 0, %s32
      %s35 = sadd.s32 1, %s19
      %s36 = scalar_select %p33, %s35, %s19
      %p37 = scmp.ge.s32.totalorder %s36, 2
      %s38 = scalar_select %p37, 0, %s36
      %s39 = ssub.s32 %s19, %s38
      %s40 = ssub.s32 %s21, %s30
      %s41 = sor.u32 %s39, %s40
      %p42 = scmp.eq.s32.totalorder %s41, 0
      %s44 = sadd.s32 %s43, 1
      %s45 = scalar_select %p42, %s43, %s44
      %p48 = pneg %p42
      %p49 = scmp.eq.s32.totalorder %s12, 1
      %p50 = por %p48, %p49
      %p51 = scmp.ne.s32.totalorder %s43, %s46
      %p52 = scmp.eq.s32.totalorder %s12, 0
      %p53 = por %p51, %p52
      %p54 = scmp.ne.s32.totalorder %s43, %s46
      %p55 = scmp.eq.s32.totalorder %s17, 1
      %p56 = por %p54, %p55
      %p57 = scmp.ne.s32.totalorder %s46, %s47
      %p58 = scmp.eq.s32.totalorder %s17, 0
      %p59 = por %p57, %p58
      %p60 = scmp.ne.s32.totalorder %s46, %s47
      %p61 = scmp.eq.s32.totalorder %s18, 1
      %p62 = por %p60, %p61
      %p64 = scmp.ne.s32.totalorder %s47, %s63
      %p65 = scmp.eq.s32.totalorder %s18, 0
      %p66 = por %p64, %p65
      %s67 = ssub.s32 %s20, %s34
      %s68 = ssub.s32 %s21, %s30
      %s69 = sor.u32 %s67, %s68
      %p70 = scmp.eq.s32.totalorder %s69, 0
      %s72 = sadd.s32 %s71, 1
      %s73 = scalar_select %p70, %s71, %s72
      %p76 = pneg %p70
      %p77 = scmp.eq.s32.totalorder %s12, 1
      %p78 = por %p76, %p77
      %p79 = scmp.ne.s32.totalorder %s71, %s74
      %p80 = scmp.eq.s32.totalorder %s12, 0
      %p81 = por %p79, %p80
      %p82 = scmp.ne.s32.totalorder %s71, %s74
      %p83 = scmp.eq.s32.totalorder %s17, 1
      %p84 = por %p82, %p83
      %p85 = scmp.ne.s32.totalorder %s74, %s75
      %p86 = scmp.eq.s32.totalorder %s17, 0
      %p87 = por %p85, %p86
      %p88 = scmp.ne.s32.totalorder %s74, %s75
      %p89 = scmp.eq.s32.totalorder %s18, 1
      %p90 = por %p88, %p89
      %p92 = scmp.ne.s32.totalorder %s75, %s91
      %p93 = scmp.eq.s32.totalorder %s18, 0
      %p94 = por %p92, %p93
      %s95 = ssub.s32 %s20, %s34
      %p96 = scmp.eq.s32.totalorder %s95, 0
      %s98 = sadd.s32 %s97, 1
      %s99 = scalar_select %p96, %s97, %s98
      %p102 = pneg %p96
      %p103 = scmp.eq.s32.totalorder %s12, 1
      %p104 = por %p102, %p103
      %p105 = scmp.ne.s32.totalorder %s97, %s100
      %p106 = scmp.eq.s32.totalorder %s12, 0
      %p107 = por %p105, %p106
      %p108 = scmp.ne.s32.totalorder %s97, %s100
      %p109 = scmp.eq.s32.totalorder %s17, 1
      %p110 = por %p108, %p109
      %p111 = scmp.ne.s32.totalorder %s100, %s101
      %p112 = scmp.eq.s32.totalorder %s17, 0
      %p113 = por %p111, %p112
      %p114 = scmp.ne.s32.totalorder %s100, %s101
      %p115 = scmp.eq.s32.totalorder %s18, 1
      %p116 = por %p114, %p115
      %p118 = scmp.ne.s32.totalorder %s101, %s117
      %p119 = scmp.eq.s32.totalorder %s18, 0
      %p120 = por %p118, %p119
      %s121 = ssub.s32 %s19, %s38
      %s122 = ssub.s32 %s20, %s34
      %s123 = sor.u32 %s121, %s122
      %p124 = scmp.eq.s32.totalorder %s123, 0
      %s126 = sadd.s32 %s125, 1
      %s127 = scalar_select %p124, %s125, %s126
      %p130 = pneg %p124
      %p131 = scmp.eq.s32.totalorder %s12, 1
      %p132 = por %p130, %p131
      %p133 = scmp.ne.s32.totalorder %s125, %s128
      %p134 = scmp.eq.s32.totalorder %s12, 0
      %p135 = por %p133, %p134
      %p136 = scmp.ne.s32.totalorder %s125, %s128
      %p137 = scmp.eq.s32.totalorder %s17, 1
      %p138 = por %p136, %p137
      %p139 = scmp.ne.s32.totalorder %s128, %s129
      %p140 = scmp.eq.s32.totalorder %s17, 0
      %p141 = por %p139, %p140
      %p142 = scmp.ne.s32.totalorder %s128, %s129
      %p143 = scmp.eq.s32.totalorder %s18, 1
      %p144 = por %p142, %p143
      %p146 = scmp.ne.s32.totalorder %s129, %s145
      %p147 = scmp.eq.s32.totalorder %s18, 0
      %p148 = por %p146, %p147
      %p149 = scmp.le.s32.totalorder 1, %s12
      %p150 = scmp.lt.s32.totalorder %s12, 3
      %p151 = pnand %p149, %p150
      %p152 = pneg %p151
      // Predicated region
      $region9: #{column_parallel_linear.1} parent=5 // pred_check
        _
      $region10: #{column_parallel_linear.1} parent=5 // pred_check_branch
        %154 = sbr.rel (%p151) target = $region12
      $region11: #{column_parallel_linear.1} parent=5 // pred_region
        %s155 = ssub.s32 %s12, 1
        // Predicated region
        $region13: #{column_parallel_linear.1} parent=11 // pred_check
          %p156 = pneg %p87
        $region14: #{column_parallel_linear.1} parent=11 // pred_check_branch
          %158 = sbr.rel (%p156) target = $region16
        $region15: #{column_parallel_linear.1} parent=11 // pred_region
          %s159 = smul.u32 8, %s23
          %p160 = scmp.lt.s32.totalorder %s159, 7
          %s161 = scalar_select %p160, %s159, 7
          %p162 = scmp.lt.s32.totalorder %s24, 0
          %s163 = scalar_select %p162, %s24, 0
          %s164 = sadd.s32 %s163, %s161
          %s165 = smul.addr %s164, 8
          %s166 = scalar_lea.vmem %s1, %s165
          %s167 = smul.u32 8, %s23
        $region16: #{column_parallel_linear.1} parent=11 // pred_fallthru
          _
        // Predicated region
        $region17: #{column_parallel_linear.1} parent=11 // pred_check
          %p168 = pneg %p113
        $region18: #{column_parallel_linear.1} parent=11 // pred_check_branch
          %170 = sbr.rel (%p168) target = $region20
        $region19: #{column_parallel_linear.1} parent=11 // pred_region
          %p171 = scmp.lt.s32.totalorder %s23, 0
          %s172 = scalar_select %p171, %s23, 0
          %s173 = scalar_lea.vmem %s2, %s172
        $region20: #{column_parallel_linear.1} parent=11 // pred_fallthru
          _
      $region12: #{column_parallel_linear.1} parent=5 // pred_fallthru
        _
      %p174 = scmp.lt.s32.totalorder %s12, 2
      // Predicated region
      $region21: #{column_parallel_linear.1} parent=5 // pred_check
        %p175 = pneg %p174
      $region22: #{column_parallel_linear.1} parent=5 // pred_check_branch
        %177 = sbr.rel (%p175) target = $region24
      $region23: #{column_parallel_linear.1} parent=5 // pred_region
        // Predicated region
        $region25: #{column_parallel_linear.1} parent=23 // pred_check
          %p178 = pneg %p53
        $region26: #{column_parallel_linear.1} parent=23 // pred_check_branch
          %180 = sbr.rel (%p178) target = $region28
        $region27: #{column_parallel_linear.1} parent=23 // pred_region
          %p181 = scmp.lt.s32.totalorder %s19, 1
          %s182 = scalar_select %p181, %s19, 1
          %p183 = scmp.lt.s32.totalorder %s21, 0
          %s184 = scalar_select %p183, %s21, 0
          %s185 = sadd.s32 %s184, %s182
          %s186 = smul.addr %s185, 8
          %s187 = scalar_lea.vmem %s0, %s186
        $region28: #{column_parallel_linear.1} parent=23 // pred_fallthru
          _
      $region24: #{column_parallel_linear.1} parent=5 // pred_fallthru
        _
      %p188 = scmp.le.s32.totalorder 1, %s12
      %p189 = scmp.lt.s32.totalorder %s12, 3
      %p190 = pnand %p188, %p189
      %p191 = pneg %p190
      // Predicated region
      $region29: #{column_parallel_linear.1} parent=5 // pred_check
        _
      $region30: #{column_parallel_linear.1} parent=5 // pred_check_branch
        %193 = sbr.rel (%p190) target = $region32
      $region31: #{column_parallel_linear.1} parent=5 // pred_region
        %s194 = ssub.s32 %s12, 1
        %p195 = scmp.lt.s32.totalorder %s22, 1
        %s196 = scalar_select %p195, %s22, 1
        %p197 = scmp.lt.s32.totalorder %s24, 0
        %s198 = scalar_select %p197, %s24, 0
        %s199 = sadd.s32 %s198, %s196
        %s200 = smul.addr %s199, 8
        %s201 = scalar_lea.vmem %s0, %s200
        %p202 = pneg %p59
        %p203 = pneg %p56
        %s204 = smul.u32 8, %s23
        %p205 = scmp.lt.s32.totalorder %s204, 7
        %s206 = scalar_select %p205, %s204, 7
        %p207 = scmp.lt.s32.totalorder %s24, 0
        %s208 = scalar_select %p207, %s24, 0
        %s209 = sadd.s32 %s208, %s206
        %s210 = smul.addr %s209, 8
        %s211 = scalar_lea.vmem %s1, %s210
        %p212 = pneg %p87
        %p213 = pneg %p84
        %p214 = scmp.lt.s32.totalorder %s23, 0
        %s215 = scalar_select %p214, %s23, 0
        %s216 = scalar_lea.vmem %s2, %s215
        %p217 = pneg %p113
        %p218 = pneg %p110
        %p219 = pneg %p141
        %p220 = pneg %p138
        %s221 = sand.u32 %s128, 1
        %s222 = scalar_lea.sflag [#allocation3], %s221
        %s223 = sand.u32 %s128, 1
        %s224 = smul.addr %s223, 8
        %s225 = scalar_lea.vmem [#allocation2], %s224
        %p226 = scmp.lt.s32.totalorder %s22, 1
        %s227 = scalar_select %p226, %s22, 1
        %p228 = scmp.lt.s32.totalorder %s24, 0
        %s229 = scalar_select %p228, %s24, 0
        %s230 = sadd.s32 %s229, %s227
        %s231 = smul.addr %s230, 8
        %s232 = scalar_lea.vmem %s0, %s231
        %s233 = smul.u32 8, %s23
        %p234 = scmp.lt.s32.totalorder %s233, 7
        %s235 = scalar_select %p234, %s233, 7
        %p236 = scmp.lt.s32.totalorder %s24, 0
        %s237 = scalar_select %p236, %s24, 0
        %s238 = sadd.s32 %s237, %s235
        %s239 = smul.addr %s238, 8
        %s240 = scalar_lea.vmem %s1, %s239
        %s241 = smul.u32 8, %s23
        %p242 = scmp.lt.s32.totalorder %s23, 0
        %s243 = scalar_select %p242, %s23, 0
        %s244 = scalar_lea.vmem %s2, %s243
        %p245 = scmp.eq.s32.totalorder %s24, 0
        // Predicated region
        $region33: #{column_parallel_linear.1} parent=31 // pred_check
          %p246 = pneg %p245
        $region34: #{column_parallel_linear.1} parent=31 // pred_check_branch
          %248 = sbr.rel (%p246) target = $region36
        $region35: #{column_parallel_linear.1} parent=31 // pred_region
          %v249 = vld [vmem:[%s244] sm:$0x1]
          %v251 = vlaneseq
          %v252 = vshrl.u32 %v251, 7
          %v253 = vsub.s32 0, %v252
          %v254 = vrot.slane %v249, %v253
          %vm256 = vcmask 523264
          %257 = vst.msk [vmem:[%s225] sm:$0xff] %vm256, %v254
        $region36: #{column_parallel_linear.1} parent=31 // pred_fallthru
          _
        %v258 = vld [vmem:[%s232] sm:$0xff]
        %v259 = vld [vmem:[%s240] sm:$0xff]
        %v260 = vld [vmem:[%s240 + $0x8] sm:$0xff]
        %v261 = vld [vmem:[%s240 + $0x10] sm:$0xff]
        %v262 = vld [vmem:[%s240 + $0x18] sm:$0xff]
        %v263 = vld [vmem:[%s240 + $0x20] sm:$0xff]
        %v264 = vld [vmem:[%s240 + $0x28] sm:$0xff]
        %v265 = vld [vmem:[%s240 + $0x30] sm:$0xff]
        %v266 = vld [vmem:[%s240 + $0x38] sm:$0xff]
        %v267 = vld [vmem:[%s225] sm:$0xff]
        %vm268 = vcmask 261120
        %v270 = vsel %vm268, %v258, 0
        %v273 = vsel %vm268, %v259, 0
        %v276 = vsel %vm268, %v260, 0
        %v279 = vsel %vm268, %v261, 0
        %v282 = vsel %vm268, %v262, 0
        %v285 = vsel %vm268, %v263, 0
        %v288 = vsel %vm268, %v264, 0
        %v291 = vsel %vm268, %v265, 0
        %v294 = vsel %vm268, %v266, 0
        %296 = vmatprep.subr.mxu0 0.0
        %297 = vmatpush1.xpose.msra.mxu0 %v273
        %298 = vmatprep.subr.mxu0 0.0
        %299 = vmatpush1.xpose.msra.mxu0 %v276
        %300 = vmatprep.subr.mxu0 0.0
        %301 = vmatpush1.xpose.msra.mxu0 %v279
        %302 = vmatprep.subr.mxu0 0.0
        %303 = vmatpush1.xpose.msra.mxu0 %v282
        %304 = vmatprep.subr.mxu0 0.0
        %305 = vmatpush1.xpose.msra.mxu0 %v285
        %306 = vmatprep.subr.mxu0 0.0
        %307 = vmatpush1.xpose.msra.mxu0 %v288
        %308 = vmatprep.subr.mxu0 0.0
        %309 = vmatpush1.xpose.msra.mxu0 %v291
        %310 = vmatprep.subr.mxu0 0.0
        %311 = vmatpush1.xpose.msra.mxu0 %v294
        %312 = vmatprep.subr.mxu0 0.0
        %313 = vmatpush1.xpose.msra.mxu0 0.0
        %314 = vmatprep.subr.mxu0 0.0
        %315 = vmatpush1.xpose.msra.mxu0 0.0
        %316 = vmatprep.subr.mxu0 0.0
        %317 = vmatpush1.xpose.msra.mxu0 0.0
        %318 = vmatprep.subr.mxu0 0.0
        %319 = vmatpush1.xpose.msra.mxu0 0.0
        %320 = vmatprep.subr.mxu0 0.0
        %321 = vmatpush1.xpose.msra.mxu0 0.0
        %322 = vmatprep.subr.mxu0 0.0
        %323 = vmatpush1.xpose.msra.mxu0 0.0
        %324 = vmatprep.subr.mxu0 0.0
        %325 = vmatpush1.xpose.msra.mxu0 0.0
        %326 = vmatprep.subr.mxu0 0.0
        %327 = vmatpush1.xpose.msra.mxu0 0.0
        %328 = vmatprep.subr.mxu0 0.0
        %329 = vmatpush1.xpose.msra.mxu0 0.0
        %330 = vmatprep.subr.mxu0 0.0
        %331 = vmatpush1.xpose.msra.mxu0 0.0
        %332 = vmatprep.subr.mxu0 0.0
        %333 = vmatpush1.xpose.msra.mxu0 0.0
        %334 = vmatprep.subr.mxu0 0.0
        %335 = vmatpush1.xpose.msra.mxu0 0.0
        %336 = vmatprep.subr.mxu0 0.0
        %337 = vmatpush1.xpose.msra.mxu0 0.0
        %338 = vmatprep.subr.mxu0 0.0
        %339 = vmatpush1.xpose.msra.mxu0 0.0
        %340 = vmatprep.subr.mxu0 0.0
        %341 = vmatpush1.xpose.msra.mxu0 0.0
        %342 = vmatprep.subr.mxu0 0.0
        %343 = vmatpush1.xpose.msra.mxu0 0.0
        %344 = vmatprep.subr.mxu0 0.0
        %345 = vmatpush1.xpose.msra.mxu0 0.0
        %346 = vmatprep.subr.mxu0 0.0
        %347 = vmatpush1.xpose.msra.mxu0 0.0
        %348 = vmatprep.subr.mxu0 0.0
        %349 = vmatpush1.xpose.msra.mxu0 0.0
        %350 = vmatprep.subr.mxu0 0.0
        %351 = vmatpush1.xpose.msra.mxu0 0.0
        %352 = vmatprep.subr.mxu0 0.0
        %353 = vmatpush1.xpose.msra.mxu0 0.0
        %354 = vmatprep.subr.mxu0 0.0
        %355 = vmatpush1.xpose.msra.mxu0 0.0
        %356 = vmatprep.subr.mxu0 0.0
        %357 = vmatpush1.xpose.msra.mxu0 0.0
        %358 = vmatprep.subr.mxu0 0.0
        %359 = vmatpush1.xpose.msra.mxu0 0.0
        %360 = vmatprep.mubr.f32.mxu0 0.0
        %361 = vmatmul.mubr.f32.gmra.mrb[0].mxu0 %v270
        %v362 = vpop.f32.mrb[0].mxu0
        %v363 = vadd.f32 0.0, %v362
        %v364 = vpop.f32.mrb[0].mxu0
        %365 = vdwg.mxu0
        %v366 = vadd.f32 %v267, %v363
        %vm367 = vcmask 523264
        %368 = vst.msk [vmem:[%s225] sm:$0xff] %vm367, %v366
        %s369 = sand.u32 %s128, 1
        %s370 = scalar_lea.sflag [#allocation3], %s369
        %s371 = sand.u32 %s128, 1
        %s372 = smul.addr %s371, 8
        %s373 = scalar_lea.vmem [#allocation2], %s372
        // Predicated region
        $region37: #{column_parallel_linear.1} parent=31 // pred_check
          %p374 = pneg %p138
        $region38: #{column_parallel_linear.1} parent=31 // pred_check_branch
          %376 = sbr.rel (%p374) target = $region40
        $region39: #{column_parallel_linear.1} parent=31 // pred_region
          %s378 = ssub.s32 128, 128
          %379 = vsyncadd %s370, %s378
          %s380 = sadd.s32 %s23, %s22
          %s381 = smul.addr %s380, 128
          %s382 = scalar_lea.hbm %s3, %s381
          %s384 = sshll.u32 %s373, 4
          %s385 = int_to_ptr.vmem [resolvable:$true] %s384
          %387 = dma.vmem_to_hbm [thread:$0]  %s385, 128, %s382, %s370
        $region40: #{column_parallel_linear.1} parent=31 // pred_fallthru
          _
      $region32: #{column_parallel_linear.1} parent=5 // pred_fallthru
        _
      %p388 = scmp.le.s32.totalorder 2, %s12
      // Predicated region
      $region41: #{column_parallel_linear.1} parent=5 // pred_check
        %p389 = pneg %p388
      $region42: #{column_parallel_linear.1} parent=5 // pred_check_branch
        %391 = sbr.rel (%p389) target = $region44
      $region43: #{column_parallel_linear.1} parent=5 // pred_region
        %s392 = ssub.s32 %s12, 2
        // Predicated region
        $region45: #{column_parallel_linear.1} parent=43 // pred_check
          %p393 = pneg %p144
        $region46: #{column_parallel_linear.1} parent=43 // pred_check_branch
          %395 = sbr.rel (%p393) target = $region48
        $region47: #{column_parallel_linear.1} parent=43 // pred_region
          %s396 = sand.u32 %s129, 1
          %s397 = scalar_lea.sflag [#allocation3], %s396
          %s398 = sand.u32 %s129, 1
          %s399 = smul.addr %s398, 8
          %s400 = scalar_lea.vmem [#allocation2], %s399
          %401 = dma.done %s397, 128
        $region48: #{column_parallel_linear.1} parent=43 // pred_fallthru
          _
      $region44: #{column_parallel_linear.1} parent=5 // pred_fallthru
        _
    $region6: #{column_parallel_linear.1} parent=1 // loop_footer
      %s16 = sadd.s32 1, %s12
    $region7: #{column_parallel_linear.1} parent=1 // loop_footer_branch
      %11 = sbr.rel target = $region3
    $region8: #{column_parallel_linear.1} parent=1 // loop_exit
      _
    %402 = vsyncpa [#allocation3], 1
    %s403 = scalar_lea.sflag [#allocation3], 1
    %404 = vsyncpa %s403, 1

</llo_original>
